<compile_context>
chip_gen: v6e
topology: v6e:2x2x1
jax: 0.10.0
libtpu: 0.0.40
codegen_flags: <defaults>
</compile_context>

<pallas_src>
import math

import jax
import jax.numpy as jnp
from jax.experimental import pallas as pl
from jax.experimental.pallas import tpu as pltpu


# ---------------------------------------------------------------------------
# Identity: zero-copy aliased kernel (primary path)
# ---------------------------------------------------------------------------
def _alias_identity_kernel(x_hbm_ref, o_hbm_ref):
    # Output buffer is aliased to the input buffer, so no data movement is needed.
    # touch() records a fake read/write so the aliased output is treated as being
    # produced by this kernel (ordering only, no DMA).
    del x_hbm_ref
    pltpu.touch(o_hbm_ref)


def _identity_alias(x):
    return pl.pallas_call(
        _alias_identity_kernel,
        out_shape=jax.ShapeDtypeStruct(x.shape, x.dtype),
        in_specs=[pl.BlockSpec(memory_space=pl.ANY)],
        out_specs=pl.BlockSpec(memory_space=pl.ANY),
        input_output_aliases={0: 0},
    )(x)


# ---------------------------------------------------------------------------
# Identity: tuned streaming-copy kernel (fallback path)
# ---------------------------------------------------------------------------
_TARGET_BLOCK_BYTES = 2 * 1024 * 1024  # past the measured roofline knee, VMEM-safe


def _copy_kernel(x_ref, o_ref):
    o_ref[...] = x_ref[...]


def _identity_copy(x):
    """Streaming HBM->HBM copy via Pallas (used only if aliasing is unavailable)."""
    orig_shape = x.shape
    total = math.prod(orig_shape) if orig_shape else 1
    if total == 0:
        return x
    itemsize = jnp.dtype(x.dtype).itemsize

    if total % 128 == 0:
        # Lane-dense factorization: last dim a multiple of 128 (up to 4096 lanes).
        cols = 128
        while total % (cols * 2) == 0 and cols < 4096:
            cols *= 2
        rows = total // cols
        # Sublane packing unit: 8 for 32-bit, 16 for bf16/f16, 32 for int8/fp8.
        sub = max(8, 32 // max(1, itemsize))
        target_rows = max(sub, _TARGET_BLOCK_BYTES // (cols * itemsize))
        if rows <= target_rows:
            block_rows = rows                     # block == full dim -> always legal
        else:
            block_rows = max(sub, (target_rows // sub) * sub)
        block = (block_rows, cols)
        grid = (pl.cdiv(rows, block_rows),)       # Pallas masks the partial tail
        index_map = lambda i: (i, 0)
    else:
        # Ragged total: (1, total) view, tiled along the lane axis; the tail block
        # is masked by Pallas, so no padding / tail slicing is needed.
        rows, cols = 1, total
        if total * itemsize <= _TARGET_BLOCK_BYTES or total < 128:
            block = (1, cols)                     # full-dim block: always legal
            grid = (1,)
        else:
            block_cols = max(128, (_TARGET_BLOCK_BYTES // itemsize // 128) * 128)
            block = (1, block_cols)
            grid = (pl.cdiv(cols, block_cols),)
        index_map = lambda i: (0, i)

    x2d = x.reshape(rows, cols)
    out2d = pl.pallas_call(
        _copy_kernel,
        out_shape=jax.ShapeDtypeStruct((rows, cols), x.dtype),
        grid=grid,
        in_specs=[pl.BlockSpec(block, index_map)],
        out_specs=pl.BlockSpec(block, index_map),
        compiler_params=pltpu.CompilerParams(
            dimension_semantics=("parallel",),
            vmem_limit_bytes=32 * 1024 * 1024,    # 2 MiB blocks, dbl-buffered in+out
        ),
    )(x2d)
    return out2d.reshape(orig_shape)


# ---------------------------------------------------------------------------
# Identity dispatch: prefer the zero-copy path, fall back to streaming copy.
# ---------------------------------------------------------------------------
_ALIAS_PATH_OK = None  # resolved lazily on first call


def pallas_identity(x):
    """nn.Identity as a Pallas kernel (zero-copy aliased, with copy fallback)."""
    global _ALIAS_PATH_OK
    if _ALIAS_PATH_OK is None:
        try:
            out = _identity_alias(x)
            _ALIAS_PATH_OK = True
            return out
        except Exception:
            _ALIAS_PATH_OK = False
    if _ALIAS_PATH_OK:
        return _identity_alias(x)
    return _identity_copy(x)


# ---------------------------------------------------------------------------
# TimeDistributed wrapper (matches the PyTorch reference forward())
# ---------------------------------------------------------------------------
class TimeDistributed:
    """Applies `module` to (batch, time, ...) by folding time into batch."""

    def __init__(self, module):
        self.module = module

    def __call__(self, input_seq):
        assert input_seq.ndim > 2, "TimeDistributed expects (batch, time, ...)"
        batch_size, time_steps = input_seq.shape[0], input_seq.shape[1]
        folded = input_seq.reshape((batch_size * time_steps,) + input_seq.shape[2:])
        output = self.module(folded)
        return output.reshape((batch_size, time_steps) + output.shape[1:])


if __name__ == "__main__":
    key = jax.random.PRNGKey(0)
    # (batch=2, time=8, channels=4, H=16, W=16): NCHW frames over a time axis,
    # consistent with how TimeDistributed wraps the conv stack in the script.
    x = jax.random.normal(key, (2, 8, 4, 16, 16), dtype=jnp.float32)

    td = TimeDistributed(pallas_identity)
    y = td(x)
    jax.block_until_ready(y)

    assert y.shape == x.shape, f"shape mismatch: {y.shape} vs {x.shape}"
    assert y.dtype == x.dtype, f"dtype mismatch: {y.dtype} vs {x.dtype}"
    assert bool(jnp.all(y == x)), "TimeDistributed(identity) output differs from input"

    # Also exercise the tuned streaming-copy kernel directly (fallback path),
    # on both a 128-divisible and a ragged element count.
    folded = x.reshape((x.shape[0] * x.shape[1],) + x.shape[2:])
    y_copy = _identity_copy(folded)
    jax.block_until_ready(y_copy)
    assert y_copy.shape == folded.shape and y_copy.dtype == folded.dtype
    assert bool(jnp.all(y_copy == folded)), "streaming-copy identity mismatch"

    ragged = jax.random.normal(jax.random.PRNGKey(1), (5, 7, 9), dtype=jnp.float32)
    r_copy = _identity_copy(ragged)
    jax.block_until_ready(r_copy)
    assert bool(jnp.all(r_copy == ragged)), "ragged streaming-copy identity mismatch"

    print("KERNEL_OK")
</pallas_src>

<mosaic_0001>
module attributes {stable_mosaic.version = 11 : i64} {
  func.func @_alias_identity_kernel(%arg0: memref<16x4x16x16xf32, #tpu.memory_space<any>>, %arg1: memref<16x4x16x16xf32, #tpu.memory_space<any>>) attributes {dimension_semantics = [], scalar_prefetch = 0 : i64, scratch_operands = 0 : i64, tpu.core_type = #tpu.core_type<tc>} {
    return
  }
}

module attributes {stable_mosaic.version = 11 : i64} {
  func.func @_copy_kernel(%arg0: i32, %arg1: memref<4x4096xf32, #tpu.memory_space<vmem>>, %arg2: memref<4x4096xf32, #tpu.memory_space<vmem>>) attributes {dimension_semantics = [#tpu.dimension_semantics<parallel>], iteration_bounds = array<i64: 1>, scalar_prefetch = 0 : i64, scratch_operands = 0 : i64, tpu.core_type = #tpu.core_type<tc>, window_params = [{transform_indices = @transform_0, window_bounds = array<i64: 4, 4096>}, {transform_indices = @transform_1, window_bounds = array<i64: 4, 4096>}]} {
    %c0 = arith.constant 0 : index
    %c0_0 = arith.constant 0 : index
    %0 = vector.load %arg1[%c0, %c0_0] : memref<4x4096xf32, #tpu.memory_space<vmem>>, vector<4x4096xf32>
    %c0_1 = arith.constant 0 : index
    %c0_2 = arith.constant 0 : index
    %1 = vector.load %arg2[%c0_1, %c0_2] : memref<4x4096xf32, #tpu.memory_space<vmem>>, vector<4x4096xf32>
    tpu.vector_store %arg2[%c0_1, %c0_2], %0 {strides = array<i32>} : memref<4x4096xf32, #tpu.memory_space<vmem>>, vector<4x4096xf32>,
    return
  }
  func.func @transform_0(%arg0: i32) -> (i32, i32) {
    %c0_i32 = arith.constant 0 : i32
    %c0_i32_0 = arith.constant 0 : i32
    return %arg0, %c0_i32 : i32, i32
  }
  func.func @transform_1(%arg0: i32) -> (i32, i32) {
    %c0_i32 = arith.constant 0 : i32
    %c0_i32_0 = arith.constant 0 : i32
    return %arg0, %c0_i32 : i32, i32
  }
}

</mosaic_0001>

<llo_original>
// kernel: tpu_custom_call.1
$region0: #{tpu_custom_call.1}
  #allocation0 [shape = 'u32[]', space=smem, size = 0x4, offset = 0x4, fixed_abs, tag = 'smem constant byte address 0x4 - core index']
  #allocation1 [shape = 'u32[144,128]{1,0:T(1,128)}', space=vmem, size = 0x12000, scoped, tag = 'internal scratch']
  %s0 = inlined_call_operand.hbm [shape: f32[16,4,16,16], index: 0, kind: input, shape index: {}, may-alias: {0,1}]
  %s1 = inlined_call_operand.hbm [shape: f32[16,4,16,16], index: 1, kind: output, shape index: {}, may-alias: {0,1}]
  %s2 = sld [smem:[#allocation0]]
  $region2: #{tpu_custom_call.1} parent=0
    _
  %s4 = ssub.s32 1, %s2
  %s5 = scalar_select 0, %s4, %s2

// kernel: tpu_custom_call.1
$region0: #{tpu_custom_call.1}
  #allocation0 [shape = 'u32[]', space=smem, size = 0x4, offset = 0x4, fixed_abs, tag = 'smem constant byte address 0x4 - core index']
  #allocation1 [shape = 'u32[144,128]{1,0:T(1,128)}', space=vmem, size = 0x12000, scoped, tag = 'internal scratch']
  %s0 = inlined_call_operand.hbm [shape: f32[4,4096], index: 0, kind: input, shape index: {}]
  %s1 = inlined_call_operand.hbm [shape: f32[4,4096], index: 1, kind: output, shape index: {}]
  %s2 = sld [smem:[#allocation0]]
  $region18: #{tpu_custom_call.1} parent=0
    _
  %s4 = ssub.s32 1, %s2
  %s5 = scalar_select 0, %s4, %s2
  $region1: #{tpu_custom_call.1} parent=0
    #allocation2 [shape = 'u8[65536]{0}', space=vmem, size = 0x10000, scoped, tag = 'input window, operand 0, single buffered']
    #allocation3 [shape = 's32[1]{0}', space=sflag, size = 0x4, scoped, tag = 'scoped memory for tpu_custom_call.1']
    #allocation4 [shape = 's32[1]{0}', space=sflag, size = 0x4, scoped, tag = 'scoped memory for tpu_custom_call.1']
    #allocation5 [shape = 'u8[65536]{0}', space=vmem, size = 0x10000, scoped, tag = 'output window, operand 0, single buffered']
    %6 = vsyncpa [#allocation3], 0
    %7 = vsyncpa [#allocation4], 0
    // Predicated region
    $region2: #{tpu_custom_call.1} parent=1 // pred_check
      _
    $region3: #{tpu_custom_call.1} parent=1 // pred_check_branch
      %9 = sbr.rel (0) target = $region5
    $region4: #{tpu_custom_call.1} parent=1 // pred_region
      %s11 = ssub.s32 2048, 2048
      %12 = vsyncadd [#allocation3], %s11
      %s14 = sshll.u32 [#allocation2], 4
      %s15 = int_to_ptr.vmem [resolvable:$true] %s14
      %17 = dma.hbm_to_vmem [thread:$0]  %s0, 2048, %s15, [#allocation3]
    $region5: #{tpu_custom_call.1} parent=1 // pred_fallthru
      _
    // Predicated region
    $region6: #{tpu_custom_call.1} parent=1 // pred_check
      _
    $region7: #{tpu_custom_call.1} parent=1 // pred_check_branch
      %19 = sbr.rel (0) target = $region9
    $region8: #{tpu_custom_call.1} parent=1 // pred_region
      %20 = dma.done [#allocation3], 2048
    $region9: #{tpu_custom_call.1} parent=1 // pred_fallthru
      _
    %v21 = vld [vmem:[#allocation2] sm:$0xff]
    %v22 = vld [vmem:[#allocation2 + $0x8] sm:$0xff]
    %v23 = vld [vmem:[#allocation2 + $0x10] sm:$0xff]
    %v24 = vld [vmem:[#allocation2 + $0x18] sm:$0xff]
    %v25 = vld [vmem:[#allocation2 + $0x20] sm:$0xff]
    %v26 = vld [vmem:[#allocation2 + $0x28] sm:$0xff]
    %v27 = vld [vmem:[#allocation2 + $0x30] sm:$0xff]
    %v28 = vld [vmem:[#allocation2 + $0x38] sm:$0xff]
    %v29 = vld [vmem:[#allocation2 + $0x40] sm:$0xff]
    %v30 = vld [vmem:[#allocation2 + $0x48] sm:$0xff]
    %v31 = vld [vmem:[#allocation2 + $0x50] sm:$0xff]
    %v32 = vld [vmem:[#allocation2 + $0x58] sm:$0xff]
    %v33 = vld [vmem:[#allocation2 + $0x60] sm:$0xff]
    %v34 = vld [vmem:[#allocation2 + $0x68] sm:$0xff]
    %v35 = vld [vmem:[#allocation2 + $0x70] sm:$0xff]
    %v36 = vld [vmem:[#allocation2 + $0x78] sm:$0xff]
    %37 = vst [vmem:[#allocation5] sm:$0xff] %v21
    %38 = vst [vmem:[#allocation5 + $0x8] sm:$0xff] %v22
    %39 = vst [vmem:[#allocation5 + $0x10] sm:$0xff] %v23
    %40 = vst [vmem:[#allocation5 + $0x18] sm:$0xff] %v24
    %41 = vst [vmem:[#allocation5 + $0x20] sm:$0xff] %v25
    %42 = vst [vmem:[#allocation5 + $0x28] sm:$0xff] %v26
    %43 = vst [vmem:[#allocation5 + $0x30] sm:$0xff] %v27
    %44 = vst [vmem:[#allocation5 + $0x38] sm:$0xff] %v28
    %45 = vst [vmem:[#allocation5 + $0x40] sm:$0xff] %v29
    %46 = vst [vmem:[#allocation5 + $0x48] sm:$0xff] %v30
    %47 = vst [vmem:[#allocation5 + $0x50] sm:$0xff] %v31
    %48 = vst [vmem:[#allocation5 + $0x58] sm:$0xff] %v32
    %49 = vst [vmem:[#allocation5 + $0x60] sm:$0xff] %v33
    %50 = vst [vmem:[#allocation5 + $0x68] sm:$0xff] %v34
    %51 = vst [vmem:[#allocation5 + $0x70] sm:$0xff] %v35
    %52 = vst [vmem:[#allocation5 + $0x78] sm:$0xff] %v36
    // Predicated region
    $region10: #{tpu_custom_call.1} parent=1 // pred_check
      _
    $region11: #{tpu_custom_call.1} parent=1 // pred_check_branch
      %54 = sbr.rel (0) target = $region13
    $region12: #{tpu_custom_call.1} parent=1 // pred_region
      %s56 = ssub.s32 2048, 2048
      %57 = vsyncadd [#allocation4], %s56
      %s59 = sshll.u32 [#allocation5], 4
      %s60 = int_to_ptr.vmem [resolvable:$true] %s59
      %62 = dma.vmem_to_hbm [thread:$0]  %s60, 2048, %s1, [#allocation4]
    $region13: #{tpu_custom_call.1} parent=1 // pred_fallthru
      _
    // Predicated region
    $region14: #{tpu_custom_call.1} parent=1 // pred_check
      _
    $region15: #{tpu_custom_call.1} parent=1 // pred_check_branch
      %64 = sbr.rel (0) target = $region17
    $region16: #{tpu_custom_call.1} parent=1 // pred_region
      %65 = dma.done [#allocation4], 2048
    $region17: #{tpu_custom_call.1} parent=1 // pred_fallthru
      _
    %66 = vsyncpa [#allocation3], 1
    %67 = vsyncpa [#allocation4], 1

</llo_original>
